<compile_context>
chip_gen: v7x
topology: tpu7x:2x2x1
jax: 0.10.0
libtpu: 0.0.40
codegen_flags: <defaults>
</compile_context>

<pallas_src>
import math
from functools import partial

import jax
import jax.numpy as jnp
from jax import lax
from jax.experimental import pallas as pl
from jax.experimental.pallas import tpu as pltpu


def hgat_kernel(adj_ref, xw_ref, w3_ref, xwsum_ref, out_ref, *, binary_adj):
    k = pl.program_id(0)
    f32 = jnp.float32

    if binary_adj:
        # adj entries are 0/1: exp(a) == 1 + (e-1)*a, so the softmax numerator is
        # colsum(xw) + (e-1) * (adj^T @ xw).  adj (bf16, exact for 0/1) is the single MXU
        # operand reused for both the edge matmul and the node matmul below.
        adj_op = adj_ref[...].astype(jnp.bfloat16)                    # int8 -> bf16
        p = lax.dot_general(adj_op, xw_ref[...],
                            dimension_numbers=(((0,), (0,)), ((), ())),
                            preferred_element_type=f32)               # (tE, F_pad)
        u = xwsum_ref[...] + f32(math.e - 1.0) * p                    # (tE, F_pad)
    else:
        # General-valued incidence: stable exp path (adj shipped as f32).
        a = adj_ref[...]                                              # (N, tE) f32
        adj_op = a.astype(jnp.bfloat16)
        m = jnp.max(a, axis=0, keepdims=True)                         # (1, tE)
        e = jnp.exp(a - m)                                            # (N, tE)
        # Transposed-LHS contraction (no materialized adj.T).
        u = lax.dot_general(e.astype(jnp.bfloat16), xw_ref[...],
                            dimension_numbers=(((0,), (0,)), ((), ())),
                            preferred_element_type=f32)               # (tE, F_pad)

    # The spare all-ones xw column makes the last column of u the softmax denominator.
    s = u[:, u.shape[-1] - 1:]                                        # (tE, 1), s > 0
    inv_s = pl.reciprocal(s, approx=False)                            # exact; tE vals/tile

    # relu(num / s) == relu(num) / s since s > 0: normalize on the small (tE,F_pad) tile.
    # TODO(synk): training-mode dropout (pltpu.prng_random_bits masks) not implemented.
    edge = jnp.maximum(u, 0.0) * inv_s                                # (tE, F_pad)

    ew3 = jnp.dot(edge.astype(jnp.bfloat16), w3_ref[...],
                  preferred_element_type=f32)                         # (tE, F_pad)

    node = jnp.dot(adj_op, ew3.astype(jnp.bfloat16),
                   preferred_element_type=f32)                        # (N, F_pad)

    @pl.when(k == 0)
    def _first():
        out_ref[...] = node

    @pl.when(k > 0)
    def _accum():
        out_ref[...] += node

    @pl.when(k == pl.num_programs(0) - 1)
    def _finalize():
        out_ref[...] = jnp.maximum(out_ref[...], 0.0)


def hgat_layer_forward(x, adj, weight, weight3, *, block_e=512, binary_adj=True):
    """x: (N, F_in), adj: (N, E) dense incidence, weight: (F_in, F_out), weight3: (F_out, F_out)."""
    N, _ = x.shape
    E = adj.shape[1]
    F_out = weight.shape[1]

    # xw = x @ W precomputed with a plain XLA matmul (full MXU/HBM efficiency); frees the
    # kernel from keeping x and W resident in VMEM across the whole grid.
    xw = jnp.dot(x.astype(jnp.float32), weight.astype(jnp.float32))

    # Lane-dense feature axis padded to a multiple of 128 with at least one spare column;
    # the spare last column of xw is set to 1 so the edge matmul emits the softmax
    # denominator as its last output column.  Zero pad columns/rows are inert everywhere
    # (weight3 rows past F_out are zero), and we slice them off at the end.
    F_pad = pl.cdiv(F_out + 1, 128) * 128
    ones_col = F_pad - 1
    xw_aug = (jnp.zeros((N, F_pad), jnp.float32)
              .at[:, :F_out].set(xw)
              .at[:, ones_col].set(1.0))
    xw_bf = xw_aug.astype(jnp.bfloat16)
    # Column sums of the *bf16* xw (f32 accumulate) so the binary-path numerator is
    # consistent with the bf16 MXU operand.
    xw_colsum = jnp.sum(xw_bf.astype(jnp.float32), axis=0, keepdims=True)   # (1, F_pad)

    w3_p = jnp.zeros((F_pad, F_pad), jnp.float32).at[:F_out, :F_out].set(
        weight3.astype(jnp.float32))
    w3_bf = w3_p.astype(jnp.bfloat16)

    # Tile the hyperedge axis (reduction axis of the final adj @ (...) matmul).
    tE = block_e if E >= block_e else E
    E_pad = pl.cdiv(E, tE) * tE
    if E_pad != E:
        # Zero hyperedge columns contribute nothing to `node` (their adj column is zero).
        adj = jnp.pad(adj, ((0, 0), (0, E_pad - E)))

    if binary_adj:
        adj_in = adj.astype(jnp.int8)      # 1 B/elem HBM stream (adj is the dominant stream)
    else:
        adj_in = adj.astype(jnp.float32)   # general-valued incidence: keep full precision

    # Generation-aware VMEM budget: ~5/8 of physical, capped at 64 MiB (=> ~40 MiB on v7x,
    # 64 MiB on v5e/v6e), leaving headroom for double-buffered adj tiles + Mosaic scratch.
    try:
        vmem_cap = pltpu.get_tpu_info().vmem_capacity_bytes
    except Exception:
        vmem_cap = 128 * 1024 * 1024
    vmem_limit = int(min(64 * 1024 * 1024, vmem_cap * 5 // 8))

    grid = (E_pad // tE,)

    # TODO(synk): two-stage split (E-"parallel" edge/ew3 pass + N-"parallel" node pass) to
    # use both v7x TensorCores; kept single-pass here so adj streams from HBM only once.
    out = pl.pallas_call(
        partial(hgat_kernel, binary_adj=binary_adj),
        out_shape=jax.ShapeDtypeStruct((N, F_pad), jnp.float32),
        grid_spec=pltpu.PrefetchScalarGridSpec(
            num_scalar_prefetch=0,
            grid=grid,
            in_specs=[
                pl.BlockSpec((N, tE), lambda k: (0, k)),          # adj  (pipelined over E)
                pl.BlockSpec((N, F_pad), lambda k: (0, 0)),       # xw   (resident)
                pl.BlockSpec((F_pad, F_pad), lambda k: (0, 0)),   # W3   (resident)
                pl.BlockSpec((1, F_pad), lambda k: (0, 0)),       # colsum(xw) (resident)
            ],
            out_specs=pl.BlockSpec((N, F_pad), lambda k: (0, 0)), # node accumulator
        ),
        compiler_params=pltpu.CompilerParams(
            dimension_semantics=("arbitrary",),                    # E is a reduction axis
            vmem_limit_bytes=vmem_limit,
        ),
    )(adj_in, xw_bf, w3_bf, xw_colsum)

    return out[:, :F_out]


def reference_forward(x, adj, weight, weight3):
    xw = x @ weight
    adjt = jax.nn.softmax(adj.T, axis=1)
    edge = jax.nn.relu(adjt @ xw)
    node = adj @ (edge @ weight3)
    return jax.nn.relu(node)


if __name__ == "__main__":
    # Small shapes implied by the module: N nodes, E hyperedges, feature dims.
    N, E = 16, 8
    in_features, out_features = 32, 32

    key = jax.random.PRNGKey(0)
    kx, kadj, kw, kw2, kw3 = jax.random.split(key, 5)

    x = jax.random.normal(kx, (N, in_features), dtype=jnp.float32)
    # dense incidence-like matrix (binary, sparse-ish)
    adj = (jax.random.uniform(kadj, (N, E)) > 0.5).astype(jnp.float32)

    # reset_parameters(): uniform(-stdv, stdv) with stdv = 1/sqrt(out_features)
    stdv = 1.0 / math.sqrt(out_features)
    weight = jax.random.uniform(kw, (in_features, out_features),
                                minval=-stdv, maxval=stdv, dtype=jnp.float32)
    weight2 = jax.random.uniform(kw2, (in_features, out_features),
                                 minval=-stdv, maxval=stdv, dtype=jnp.float32)  # unused (transfer=True)
    weight3 = jax.random.uniform(kw3, (out_features, out_features),
                                 minval=-stdv, maxval=stdv, dtype=jnp.float32)

    out = hgat_layer_forward(x, adj, weight, weight3)
    out = jax.block_until_ready(out)

    ref = reference_forward(x, adj, weight, weight3)
    assert out.shape == (N, out_features)
    # Tolerance accounts for bf16 MXU operands (f32 accumulation).
    assert jnp.allclose(out, ref, atol=5e-2, rtol=5e-2), "mismatch vs pure-JAX reference"

    print("KERNEL_OK")
</pallas_src>

<mosaic_0001>
module attributes {stable_mosaic.version = 11 : i64} {
  func.func @hgat_kernel(%arg0: i32, %arg1: memref<16x8xi8, #tpu.memory_space<vmem>>, %arg2: memref<16x128xbf16, #tpu.memory_space<vmem>>, %arg3: memref<128x128xbf16, #tpu.memory_space<vmem>>, %arg4: memref<1x128xf32, #tpu.memory_space<vmem>>, %arg5: memref<16x128xf32, #tpu.memory_space<vmem>>) attributes {dimension_semantics = [#tpu.dimension_semantics<arbitrary>], iteration_bounds = array<i64: 1>, scalar_prefetch = 0 : i64, scratch_operands = 0 : i64, tpu.core_type = #tpu.core_type<tc>, window_params = [{transform_indices = @transform_0, window_bounds = array<i64: 16, 8>}, {pipeline_mode = #tpu.pipeline_mode<synchronous>, transform_indices = @transform_1, window_bounds = array<i64: 16, 128>}, {pipeline_mode = #tpu.pipeline_mode<synchronous>, transform_indices = @transform_2, window_bounds = array<i64: 128, 128>}, {pipeline_mode = #tpu.pipeline_mode<synchronous>, transform_indices = @transform_3, window_bounds = array<i64: 1, 128>}, {pipeline_mode = #tpu.pipeline_mode<synchronous>, transform_indices = @transform_4, window_bounds = array<i64: 16, 128>}]} {
    %c0 = arith.constant 0 : index
    %c0_0 = arith.constant 0 : index
    %0 = vector.load %arg1[%c0, %c0_0] : memref<16x8xi8, #tpu.memory_space<vmem>>, vector<16x8xi8>
    %1 = arith.sitofp %0 : vector<16x8xi8> to vector<16x8xbf16>
    %c0_1 = arith.constant 0 : index
    %c0_2 = arith.constant 0 : index
    %2 = vector.load %arg2[%c0_1, %c0_2] : memref<16x128xbf16, #tpu.memory_space<vmem>>, vector<16x128xbf16>
    %cst = arith.constant dense<0.000000e+00> : vector<8x128xf32>
    %3 = tpu.matmul %1, %2, %cst {dimension_numbers = #tpu.dot_dimension_numbers<[0], [0], [1], [1], [0, 1, 1, 1], [], []>} : vector<16x8xbf16>, vector<16x128xbf16>, vector<8x128xf32> -> vector<8x128xf32>
    %c0_3 = arith.constant 0 : index
    %c0_4 = arith.constant 0 : index
    %4 = vector.load %arg4[%c0_3, %c0_4] : memref<1x128xf32, #tpu.memory_space<vmem>>, vector<1x128xf32>
    %cst_5 = arith.constant 1.71828187 : f32
    %5 = vector.broadcast %cst_5 : f32 to vector<8x128xf32>
    %6 = arith.mulf %5, %3 : vector<8x128xf32>
    %7 = vector.broadcast %4 : vector<1x128xf32> to vector<8x128xf32>
    %8 = arith.addf %7, %6 : vector<8x128xf32>
    %9 = vector.extract_strided_slice %8 {offsets = [0, 127], sizes = [8, 1], strides = [1, 1]} : vector<8x128xf32> to vector<8x1xf32>
    %10 = tpu.reciprocal %9 : vector<8x1xf32> -> vector<8x1xf32>
    %cst_6 = arith.constant 0.000000e+00 : f32
    %11 = vector.broadcast %cst_6 : f32 to vector<8x128xf32>
    %12 = arith.maximumf %8, %11 : vector<8x128xf32>
    %13 = vector.broadcast %10 : vector<8x1xf32> to vector<8x128xf32>
    %14 = arith.mulf %12, %13 : vector<8x128xf32>
    %15 = arith.truncf %14 : vector<8x128xf32> to vector<8x128xbf16>
    %c0_7 = arith.constant 0 : index
    %c0_8 = arith.constant 0 : index
    %16 = vector.load %arg3[%c0_7, %c0_8] : memref<128x128xbf16, #tpu.memory_space<vmem>>, vector<128x128xbf16>
    %cst_9 = arith.constant dense<0.000000e+00> : vector<8x128xf32>
    %17 = tpu.matmul %15, %16, %cst_9 {dimension_numbers = #tpu.dot_dimension_numbers<[1], [0], [0], [1], [0, 0, 1, 1], [], []>} : vector<8x128xbf16>, vector<128x128xbf16>, vector<8x128xf32> -> vector<8x128xf32>
    %18 = arith.truncf %17 : vector<8x128xf32> to vector<8x128xbf16>
    %cst_10 = arith.constant dense<0.000000e+00> : vector<16x128xf32>
    %19 = tpu.matmul %1, %18, %cst_10 {dimension_numbers = #tpu.dot_dimension_numbers<[1], [0], [0], [1], [0, 0, 1, 1], [], []>} : vector<16x8xbf16>, vector<8x128xbf16>, vector<16x128xf32> -> vector<16x128xf32>
    %c0_i32 = arith.constant 0 : i32
    %20 = arith.cmpi eq, %arg0, %c0_i32 : i32
    %21 = arith.extui %20 : i1 to i32
    %c0_i32_11 = arith.constant 0 : i32
    %22 = arith.cmpi ne, %21, %c0_i32_11 : i32
    scf.if %22 {
      %c0_16 = arith.constant 0 : index
      %c0_17 = arith.constant 0 : index
      %29 = vector.load %arg5[%c0_16, %c0_17] : memref<16x128xf32, #tpu.memory_space<vmem>>, vector<16x128xf32>
      tpu.vector_store %arg5[%c0_16, %c0_17], %19 {strides = array<i32>} : memref<16x128xf32, #tpu.memory_space<vmem>>, vector<16x128xf32>,
    } else {
    }
    %c0_i32_12 = arith.constant 0 : i32
    %23 = arith.cmpi sgt, %arg0, %c0_i32_12 : i32
    %24 = arith.extui %23 : i1 to i32
    %c0_i32_13 = arith.constant 0 : i32
    %25 = arith.cmpi ne, %24, %c0_i32_13 : i32
    scf.if %25 {
      %c0_16 = arith.constant 0 : index
      %c0_17 = arith.constant 0 : index
      %29 = vector.load %arg5[%c0_16, %c0_17] : memref<16x128xf32, #tpu.memory_space<vmem>>, vector<16x128xf32>
      %30 = arith.addf %29, %19 : vector<16x128xf32>
      %c0_18 = arith.constant 0 : index
      %c0_19 = arith.constant 0 : index
      %31 = vector.load %arg5[%c0_18, %c0_19] : memref<16x128xf32, #tpu.memory_space<vmem>>, vector<16x128xf32>
      tpu.vector_store %arg5[%c0_18, %c0_19], %30 {strides = array<i32>} : memref<16x128xf32, #tpu.memory_space<vmem>>, vector<16x128xf32>,
    } else {
    }
    %c0_i32_14 = arith.constant 0 : i32
    %26 = arith.cmpi eq, %arg0, %c0_i32_14 : i32
    %27 = arith.extui %26 : i1 to i32
    %c0_i32_15 = arith.constant 0 : i32
    %28 = arith.cmpi ne, %27, %c0_i32_15 : i32
    scf.if %28 {
      %c0_16 = arith.constant 0 : index
      %c0_17 = arith.constant 0 : index
      %29 = vector.load %arg5[%c0_16, %c0_17] : memref<16x128xf32, #tpu.memory_space<vmem>>, vector<16x128xf32>
      %cst_18 = arith.constant 0.000000e+00 : f32
      %30 = vector.broadcast %cst_18 : f32 to vector<16x128xf32>
      %31 = arith.maximumf %29, %30 : vector<16x128xf32>
      %c0_19 = arith.constant 0 : index
      %c0_20 = arith.constant 0 : index
      %32 = vector.load %arg5[%c0_19, %c0_20] : memref<16x128xf32, #tpu.memory_space<vmem>>, vector<16x128xf32>
      tpu.vector_store %arg5[%c0_19, %c0_20], %31 {strides = array<i32>} : memref<16x128xf32, #tpu.memory_space<vmem>>, vector<16x128xf32>,
    } else {
    }
    return
  }
  func.func @transform_0(%arg0: i32) -> (i32, i32) {
    %c0_i32 = arith.constant 0 : i32
    %c0_i32_0 = arith.constant 0 : i32
    return %c0_i32, %arg0 : i32, i32
  }
  func.func @transform_1(%arg0: i32) -> (i32, i32) {
    %c0_i32 = arith.constant 0 : i32
    %c0_i32_0 = arith.constant 0 : i32
    %c0_i32_1 = arith.constant 0 : i32
    return %c0_i32, %c0_i32_0 : i32, i32
  }
  func.func @transform_2(%arg0: i32) -> (i32, i32) {
    %c0_i32 = arith.constant 0 : i32
    %c0_i32_0 = arith.constant 0 : i32
    %c0_i32_1 = arith.constant 0 : i32
    return %c0_i32, %c0_i32_0 : i32, i32
  }
  func.func @transform_3(%arg0: i32) -> (i32, i32) {
    %c0_i32 = arith.constant 0 : i32
    %c0_i32_0 = arith.constant 0 : i32
    %c0_i32_1 = arith.constant 0 : i32
    return %c0_i32, %c0_i32_0 : i32, i32
  }
  func.func @transform_4(%arg0: i32) -> (i32, i32) {
    %c0_i32 = arith.constant 0 : i32
    %c0_i32_0 = arith.constant 0 : i32
    %c0_i32_1 = arith.constant 0 : i32
    return %c0_i32, %c0_i32_0 : i32, i32
  }
}

</mosaic_0001>

<llo_original>
// kernel: tpu_custom_call.1
$region0: #{tpu_custom_call.1}
  #allocation0 [shape = 'u32[]', space=smem, size = 0x4, offset = 0x4, fixed_abs, tag = 'smem constant byte address 0x4 - core index']
  #allocation1 [shape = 'u32[144,128]{1,0:T(1,128)}', space=vmem, size = 0x12000, scoped, tag = 'internal scratch']
  %s0 = inlined_call_operand.hbm [shape: s8[16,8], index: 0, kind: input, shape index: {}]
  %s1 = inlined_call_operand.hbm [shape: bf16[16,128], index: 1, kind: input, shape index: {}]
  %s2 = inlined_call_operand.hbm [shape: bf16[128,128], index: 2, kind: input, shape index: {}]
  %s3 = inlined_call_operand.hbm [shape: f32[1,128], index: 3, kind: input, shape index: {}]
  %s4 = inlined_call_operand.hbm [shape: f32[16,128], index: 4, kind: output, shape index: {}]
  %s5 = sld [smem:[#allocation0]]
  $region54: #{tpu_custom_call.1} parent=0
    _
  %s7 = ssub.s32 1, %s5
  %s8 = scalar_select 0, %s7, %s5
  $region1: #{tpu_custom_call.1} parent=0
    #allocation2 [shape = 'u8[2048]{0}', space=vmem, size = 0x800, scoped, tag = 'input window, operand 0, single buffered']
    #allocation3 [shape = 's32[1]{0}', space=sflag, size = 0x4, scoped, tag = 'scoped memory for tpu_custom_call.1']
    #allocation4 [shape = 's32[1]{0}', space=sflag, size = 0x4, scoped, tag = 'scoped memory for tpu_custom_call.1']
    #allocation5 [shape = 'u8[4096]{0}', space=vmem, size = 0x1000, scoped, tag = 'input window, operand 1, single buffered']
    #allocation6 [shape = 's32[1]{0}', space=sflag, size = 0x4, scoped, tag = 'scoped memory for tpu_custom_call.1']
    #allocation7 [shape = 'u8[32768]{0}', space=vmem, size = 0x8000, scoped, tag = 'input window, operand 2, single buffered']
    #allocation8 [shape = 'u8[512]{0}', space=vmem, size = 0x400, scoped, tag = 'input window, operand 3, single buffered']
    #allocation9 [shape = 's32[1]{0}', space=sflag, size = 0x4, scoped, tag = 'scoped memory for tpu_custom_call.1']
    #allocation10 [shape = 'u8[8192]{0}', space=vmem, size = 0x2000, scoped, tag = 'output window, operand 0, single buffered']
    %9 = vsyncpa [#allocation3], 0
    %10 = vsyncpa [#allocation6], 0
    %11 = vsyncpa [#allocation9], 0
    %12 = vsyncpa [#allocation4], 0
    // Predicated region
    $region2: #{tpu_custom_call.1} parent=1 // pred_check
      _
    $region3: #{tpu_custom_call.1} parent=1 // pred_check_branch
      %14 = sbr.rel (0) target = $region5
    $region4: #{tpu_custom_call.1} parent=1 // pred_region
      %s16 = ssub.s32 64, 64
      %17 = vsyncadd [#allocation3], %s16
      %s18 = sshll.u32 [#allocation2], 4
      %s19 = int_to_ptr.vmem [resolvable:$true] %s18
      %24 = dma.hbm_to_vmem [thread:$0]  %s0, 64, %s19, [#allocation3], 32, 32, 2
    $region5: #{tpu_custom_call.1} parent=1 // pred_fallthru
      _
    // Predicated region
    $region6: #{tpu_custom_call.1} parent=1 // pred_check
      _
    $region7: #{tpu_custom_call.1} parent=1 // pred_check_branch
      %26 = sbr.rel (0) target = $region9
    $region8: #{tpu_custom_call.1} parent=1 // pred_region
      %s28 = ssub.s32 128, 128
      %29 = vsyncadd [#allocation6], %s28
      %s30 = sshll.u32 [#allocation5], 4
      %s31 = int_to_ptr.vmem [resolvable:$true] %s30
      %36 = dma.hbm_to_vmem [thread:$0]  %s1, 128, %s31, [#allocation6], 64, 64, 4
    $region9: #{tpu_custom_call.1} parent=1 // pred_fallthru
      _
    // Predicated region
    $region10: #{tpu_custom_call.1} parent=1 // pred_check
      _
    $region11: #{tpu_custom_call.1} parent=1 // pred_check_branch
      %38 = sbr.rel (0) target = $region13
    $region12: #{tpu_custom_call.1} parent=1 // pred_region
      %s40 = ssub.s32 1024, 1024
      %41 = vsyncadd [#allocation6], %s40
      %s42 = sshll.u32 [#allocation7], 4
      %s43 = int_to_ptr.vmem [resolvable:$true] %s42
      %48 = dma.hbm_to_vmem [thread:$0]  %s2, 1024, %s43, [#allocation6], 64, 64, 4
    $region13: #{tpu_custom_call.1} parent=1 // pred_fallthru
      _
    // Predicated region
    $region14: #{tpu_custom_call.1} parent=1 // pred_check
      _
    $region15: #{tpu_custom_call.1} parent=1 // pred_check_branch
      %50 = sbr.rel (0) target = $region17
    $region16: #{tpu_custom_call.1} parent=1 // pred_region
      %s52 = ssub.s32 16, 16
      %53 = vsyncadd [#allocation9], %s52
      %s55 = sshll.u32 [#allocation8], 4
      %s56 = int_to_ptr.vmem [resolvable:$true] %s55
      %58 = dma.hbm_to_vmem [thread:$0]  %s3, 16, %s56, [#allocation9]
    $region17: #{tpu_custom_call.1} parent=1 // pred_fallthru
      _
    // Predicated region
    $region18: #{tpu_custom_call.1} parent=1 // pred_check
      _
    $region19: #{tpu_custom_call.1} parent=1 // pred_check_branch
      %60 = sbr.rel (0) target = $region21
    $region20: #{tpu_custom_call.1} parent=1 // pred_region
      %61 = dma.done [#allocation3], 64
    $region21: #{tpu_custom_call.1} parent=1 // pred_fallthru
      _
    // Predicated region
    $region22: #{tpu_custom_call.1} parent=1 // pred_check
      _
    $region23: #{tpu_custom_call.1} parent=1 // pred_check_branch
      %63 = sbr.rel (0) target = $region25
    $region24: #{tpu_custom_call.1} parent=1 // pred_region
      %64 = dma.done [#allocation6], 128
    $region25: #{tpu_custom_call.1} parent=1 // pred_fallthru
      _
    // Predicated region
    $region26: #{tpu_custom_call.1} parent=1 // pred_check
      _
    $region27: #{tpu_custom_call.1} parent=1 // pred_check_branch
      %66 = sbr.rel (0) target = $region29
    $region28: #{tpu_custom_call.1} parent=1 // pred_region
      %67 = dma.done [#allocation6], 1024
    $region29: #{tpu_custom_call.1} parent=1 // pred_fallthru
      _
    // Predicated region
    $region30: #{tpu_custom_call.1} parent=1 // pred_check
      _
    $region31: #{tpu_custom_call.1} parent=1 // pred_check_branch
      %69 = sbr.rel (0) target = $region33
    $region32: #{tpu_custom_call.1} parent=1 // pred_region
      %70 = dma.done [#allocation9], 16
    $region33: #{tpu_custom_call.1} parent=1 // pred_fallthru
      _
    %v72 = vld [vmem:[#allocation2] sm:$0x3]
    %v73 = vld [vmem:[#allocation2 + $0x2] sm:$0x3]
    %v74 = vunpack.c.l.s8.bf16 %v72
    %v75 = vunpack.c.l.s8.bf16 %v73
    %v76 = vld [vmem:[#allocation5] sm:$0xf]
    %v77 = vld [vmem:[#allocation5 + $0x4] sm:$0xf]
    %v80 = vunpack.c.l.b16 %v74
    %v81 = vunpack.c.l.b16 %v75
    %v82 = vpack.c.b16 %v81, %v80
    %84 = vxpose.xlu0.c.b16.start [1/8] %v82, 128
    %85 = vxpose.xlu0.c.b16.cont [2/8] 0, 128
    %86 = vxpose.xlu0.c.b16.cont [3/8] 0, 128
    %87 = vxpose.xlu0.c.b16.cont [4/8] 0, 128
    %88 = vxpose.xlu0.c.b16.cont [5/8] 0, 128
    %89 = vxpose.xlu0.c.b16.cont [6/8] 0, 128
    %90 = vxpose.xlu0.c.b16.cont [7/8] 0, 128
    %91 = vxpose.xlu0.c.b16.end [8/8] 0, 128
    %v92 = vpop.trf.xlu0
    %v93 = vpop.trf.xlu0
    %v94 = vpop.trf.xlu0
    %v95 = vpop.trf.xlu0
    %v96 = vpop.trf.xlu0
    %v97 = vpop.trf.xlu0
    %v98 = vpop.trf.xlu0
    %v99 = vpop.trf.xlu0
    %v102 = vunpack.c.l.b16 %v76
    %v103 = vunpack.c.l.b16 %v77
    %v104 = vpack.c.b16 %v103, %v102
    %vm106 = vcmask 130048
    %v108 = vsel %vm106, %v92, 0
    %110 = vmatprep.subr.bf16.mxu0 0
    %111 = vmatpush1.bf16.msra.mxu0 %v104
    %112 = vmatprep.subr.bf16.mxu0 0
    %113 = vmatpush1.bf16.msra.mxu0 0
    %114 = vmatprep.subr.bf16.mxu0 0
    %115 = vmatpush1.bf16.msra.mxu0 0
    %116 = vmatprep.subr.bf16.mxu0 0
    %117 = vmatpush1.bf16.msra.mxu0 0
    %118 = vmatprep.subr.bf16.mxu0 0
    %119 = vmatpush1.bf16.msra.mxu0 0
    %120 = vmatprep.subr.bf16.mxu0 0
    %121 = vmatpush1.bf16.msra.mxu0 0
    %122 = vmatprep.subr.bf16.mxu0 0
    %123 = vmatpush1.bf16.msra.mxu0 0
    %124 = vmatprep.subr.bf16.mxu0 0
    %125 = vmatpush1.bf16.msra.mxu0 0
    %126 = vmatprep.subr.bf16.mxu0 0
    %127 = vmatpush1.bf16.msra.mxu0 0
    %128 = vmatprep.subr.bf16.mxu0 0
    %129 = vmatpush1.bf16.msra.mxu0 0
    %130 = vmatprep.subr.bf16.mxu0 0
    %131 = vmatpush1.bf16.msra.mxu0 0
    %132 = vmatprep.subr.bf16.mxu0 0
    %133 = vmatpush1.bf16.msra.mxu0 0
    %134 = vmatprep.subr.bf16.mxu0 0
    %135 = vmatpush1.bf16.msra.mxu0 0
    %136 = vmatprep.subr.bf16.mxu0 0
    %137 = vmatpush1.bf16.msra.mxu0 0
    %138 = vmatprep.subr.bf16.mxu0 0
    %139 = vmatpush1.bf16.msra.mxu0 0
    %140 = vmatprep.subr.bf16.mxu0 0
    %141 = vmatpush1.bf16.msra.mxu0 0
    %142 = vmatprep.mubr.bf16.mxu0 0
    %143 = vmatmul.mubr.bf16.gmra.mrb[0].mxu0 %v108
    %v144 = vpop.f32.mrb[0].mxu0
    %v145 = vadd.f32 0.0, %v144
    %v146 = vpop.f32.mrb[0].mxu0
    %v147 = vpop.f32.mrb[0].mxu0
    %v148 = vpop.f32.mrb[0].mxu0
    %149 = vdwg.mxu0
    %v150 = vld [vmem:[#allocation8] sm:$0x1]
    %v151 = vmul.f32 %v145, 1.7182819
    %v153 = vlaneseq
    %v154 = vshrl.u32 %v153, 7
    %v155 = vsub.s32 0, %v154
    %v156 = vrot.slane %v150, %v155
    %v158 = vadd.f32 %v156, %v151
    %v159 = vrcp.pop %v158
    %v160 = vmax.f32 %v158, 0.0
    %162 = vset.pattern.permute.xlu0 127
    %163 = vperm.xlu0 %162, %v159
    %v164 = vpop.permute.xlu0 %163
    %v166 = vmul.f32 %v160, %v164
    %v167 = vpack.c.bf16 %v166, %v166
    %v168 = vld [vmem:[#allocation7] sm:$0xf]
    %v169 = vld [vmem:[#allocation7 + $0x4] sm:$0xf]
    %v170 = vld [vmem:[#allocation7 + $0x8] sm:$0xf]
    %v171 = vld [vmem:[#allocation7 + $0xc] sm:$0xf]
    %v172 = vld [vmem:[#allocation7 + $0x10] sm:$0xf]
    %v173 = vld [vmem:[#allocation7 + $0x14] sm:$0xf]
    %v174 = vld [vmem:[#allocation7 + $0x18] sm:$0xf]
    %v175 = vld [vmem:[#allocation7 + $0x1c] sm:$0xf]
    %v176 = vld [vmem:[#allocation7 + $0x20] sm:$0xf]
    %v177 = vld [vmem:[#allocation7 + $0x24] sm:$0xf]
    %v178 = vld [vmem:[#allocation7 + $0x28] sm:$0xf]
    %v179 = vld [vmem:[#allocation7 + $0x2c] sm:$0xf]
    %v180 = vld [vmem:[#allocation7 + $0x30] sm:$0xf]
    %v181 = vld [vmem:[#allocation7 + $0x34] sm:$0xf]
    %v182 = vld [vmem:[#allocation7 + $0x38] sm:$0xf]
    %v183 = vld [vmem:[#allocation7 + $0x3c] sm:$0xf]
    %v200 = vunpack.c.l.b16 %v168
    %v201 = vunpack.c.l.b16 %v169
    %v202 = vunpack.c.l.b16 %v170
    %v203 = vunpack.c.l.b16 %v171
    %v204 = vunpack.c.l.b16 %v172
    %v205 = vunpack.c.l.b16 %v173
    %v206 = vunpack.c.l.b16 %v174
    %v207 = vunpack.c.l.b16 %v175
    %v208 = vunpack.c.l.b16 %v176
    %v209 = vunpack.c.l.b16 %v177
    %v210 = vunpack.c.l.b16 %v178
    %v211 = vunpack.c.l.b16 %v179
    %v212 = vunpack.c.l.b16 %v180
    %v213 = vunpack.c.l.b16 %v181
    %v214 = vunpack.c.l.b16 %v182
    %v215 = vunpack.c.l.b16 %v183
    %v216 = vpack.c.b16 %v201, %v200
    %v217 = vpack.c.b16 %v203, %v202
    %v218 = vpack.c.b16 %v205, %v204
    %v219 = vpack.c.b16 %v207, %v206
    %v220 = vpack.c.b16 %v209, %v208
    %v221 = vpack.c.b16 %v211, %v210
    %v222 = vpack.c.b16 %v213, %v212
    %v223 = vpack.c.b16 %v215, %v214
    %232 = vmatprep.subr.bf16.mxu0 0
    %233 = vmatpush1.bf16.msra.mxu0 %v216
    %234 = vmatprep.subr.bf16.mxu0 0
    %235 = vmatpush1.bf16.msra.mxu0 %v217
    %236 = vmatprep.subr.bf16.mxu0 0
    %237 = vmatpush1.bf16.msra.mxu0 %v218
    %238 = vmatprep.subr.bf16.mxu0 0
    %239 = vmatpush1.bf16.msra.mxu0 %v219
    %240 = vmatprep.subr.bf16.mxu0 0
    %241 = vmatpush1.bf16.msra.mxu0 %v220
    %242 = vmatprep.subr.bf16.mxu0 0
    %243 = vmatpush1.bf16.msra.mxu0 %v221
    %244 = vmatprep.subr.bf16.mxu0 0
    %245 = vmatpush1.bf16.msra.mxu0 %v222
    %246 = vmatprep.subr.bf16.mxu0 0
    %247 = vmatpush1.bf16.msra.mxu0 %v223
    %248 = vmatprep.subr.bf16.mxu0 0
    %249 = vmatpush1.bf16.msra.mxu0 0
    %250 = vmatprep.subr.bf16.mxu0 0
    %251 = vmatpush1.bf16.msra.mxu0 0
    %252 = vmatprep.subr.bf16.mxu0 0
    %253 = vmatpush1.bf16.msra.mxu0 0
    %254 = vmatprep.subr.bf16.mxu0 0
    %255 = vmatpush1.bf16.msra.mxu0 0
    %256 = vmatprep.subr.bf16.mxu0 0
    %257 = vmatpush1.bf16.msra.mxu0 0
    %258 = vmatprep.subr.bf16.mxu0 0
    %259 = vmatpush1.bf16.msra.mxu0 0
    %260 = vmatprep.subr.bf16.mxu0 0
    %261 = vmatpush1.bf16.msra.mxu0 0
    %262 = vmatprep.subr.bf16.mxu0 0
    %263 = vmatpush1.bf16.msra.mxu0 0
    %264 = vmatprep.mubr.bf16.mxu0 0
    %265 = vmatmul.mubr.bf16.gmra.mrb[0].mxu0 %v167
    %v266 = vpop.f32.mrb[0].mxu0
    %v267 = vadd.f32 0.0, %v266
    %v268 = vpop.f32.mrb[0].mxu0
    %v269 = vpop.f32.mrb[0].mxu0
    %v270 = vpop.f32.mrb[0].mxu0
    %271 = vdwg.mxu0
    %v272 = vpack.c.bf16 %v267, %v267
    %vm273 = vcmask 64512
    %v275 = vsel %vm273, %v82, 0
    %vm277 = vcmask 1043456
    %v279 = vsel %vm277, %v272, 0
    %281 = vmatprep.subr.bf16.mxu0 0
    %282 = vmatpush1.bf16.msra.mxu0 %v279
    %283 = vmatprep.subr.bf16.mxu0 0
    %284 = vmatpush1.bf16.msra.mxu0 0
    %285 = vmatprep.subr.bf16.mxu0 0
    %286 = vmatpush1.bf16.msra.mxu0 0
    %287 = vmatprep.subr.bf16.mxu0 0
    %288 = vmatpush1.bf16.msra.mxu0 0
    %289 = vmatprep.subr.bf16.mxu0 0
    %290 = vmatpush1.bf16.msra.mxu0 0
    %291 = vmatprep.subr.bf16.mxu0 0
    %292 = vmatpush1.bf16.msra.mxu0 0
    %293 = vmatprep.subr.bf16.mxu0 0
    %294 = vmatpush1.bf16.msra.mxu0 0
    %295 = vmatprep.subr.bf16.mxu0 0
    %296 = vmatpush1.bf16.msra.mxu0 0
    %297 = vmatprep.subr.bf16.mxu0 0
    %298 = vmatpush1.bf16.msra.mxu0 0
    %299 = vmatprep.subr.bf16.mxu0 0
    %300 = vmatpush1.bf16.msra.mxu0 0
    %301 = vmatprep.subr.bf16.mxu0 0
    %302 = vmatpush1.bf16.msra.mxu0 0
    %303 = vmatprep.subr.bf16.mxu0 0
    %304 = vmatpush1.bf16.msra.mxu0 0
    %305 = vmatprep.subr.bf16.mxu0 0
    %306 = vmatpush1.bf16.msra.mxu0 0
    %307 = vmatprep.subr.bf16.mxu0 0
    %308 = vmatpush1.bf16.msra.mxu0 0
    %309 = vmatprep.subr.bf16.mxu0 0
    %310 = vmatpush1.bf16.msra.mxu0 0
    %311 = vmatprep.subr.bf16.mxu0 0
    %312 = vmatpush1.bf16.msra.mxu0 0
    %313 = vmatprep.mubr.bf16.mxu0 0
    %314 = vmatmul.mubr.bf16.gmra.mrb[0].mxu0 %v275
    %v315 = vpop.f32.mrb[0].mxu0
    %v316 = vadd.f32 0.0, %v315
    %v317 = vpop.f32.mrb[0].mxu0
    %v318 = vpop.f32.mrb[0].mxu0
    %v319 = vadd.f32 0.0, %v318
    %v320 = vpop.f32.mrb[0].mxu0
    %321 = vdwg.mxu0
    %p322 = scmp.eq.s32.totalorder 0, 0
    // Predicated region
    $region34: #{tpu_custom_call.1} parent=1 // pred_check
      %p323 = pneg %p322
    $region35: #{tpu_custom_call.1} parent=1 // pred_check_branch
      %325 = sbr.rel (%p323) target = $region37
    $region36: #{tpu_custom_call.1} parent=1 // pred_region
      %326 = vst [vmem:[#allocation10] sm:$0xff] %v316
      %327 = vst [vmem:[#allocation10 + $0x8] sm:$0xff] %v319
    $region37: #{tpu_custom_call.1} parent=1 // pred_fallthru
      _
    %p328 = scmp.gt.s32.totalorder 0, 0
    // Predicated region
    $region38: #{tpu_custom_call.1} parent=1 // pred_check
      %p329 = pneg %p328
    $region39: #{tpu_custom_call.1} parent=1 // pred_check_branch
      %331 = sbr.rel (%p329) target = $region41
    $region40: #{tpu_custom_call.1} parent=1 // pred_region
      %v332 = vld [vmem:[#allocation10] sm:$0xff]
      %v333 = vld [vmem:[#allocation10 + $0x8] sm:$0xff]
      %v334 = vadd.f32 %v332, %v316
      %v335 = vadd.f32 %v333, %v319
      %336 = vst [vmem:[#allocation10] sm:$0xff] %v334
      %337 = vst [vmem:[#allocation10 + $0x8] sm:$0xff] %v335
    $region41: #{tpu_custom_call.1} parent=1 // pred_fallthru
      _
    // Predicated region
    $region42: #{tpu_custom_call.1} parent=1 // pred_check
      %p338 = pneg %p322
    $region43: #{tpu_custom_call.1} parent=1 // pred_check_branch
      %340 = sbr.rel (%p338) target = $region45
    $region44: #{tpu_custom_call.1} parent=1 // pred_region
      %v341 = vld [vmem:[#allocation10] sm:$0xff]
      %v342 = vld [vmem:[#allocation10 + $0x8] sm:$0xff]
      %v343 = vmax.f32 %v341, 0.0
      %v344 = vmax.f32 %v342, 0.0
      %345 = vst [vmem:[#allocation10] sm:$0xff] %v343
      %346 = vst [vmem:[#allocation10 + $0x8] sm:$0xff] %v344
    $region45: #{tpu_custom_call.1} parent=1 // pred_fallthru
      _
    // Predicated region
    $region46: #{tpu_custom_call.1} parent=1 // pred_check
      _
    $region47: #{tpu_custom_call.1} parent=1 // pred_check_branch
      %348 = sbr.rel (0) target = $region49
    $region48: #{tpu_custom_call.1} parent=1 // pred_region
      %s350 = ssub.s32 256, 256
      %351 = vsyncadd [#allocation4], %s350
      %s352 = sshll.u32 [#allocation10], 4
      %s353 = int_to_ptr.vmem [resolvable:$true] %s352
      %358 = dma.vmem_to_hbm [thread:$0]  %s353, 256, %s4, [#allocation4], 128, 128, 8
    $region49: #{tpu_custom_call.1} parent=1 // pred_fallthru
      _
    // Predicated region
    $region50: #{tpu_custom_call.1} parent=1 // pred_check
      _
    $region51: #{tpu_custom_call.1} parent=1 // pred_check_branch
      %360 = sbr.rel (0) target = $region53
    $region52: #{tpu_custom_call.1} parent=1 // pred_region
      %361 = dma.done [#allocation4], 256
    $region53: #{tpu_custom_call.1} parent=1 // pred_fallthru
      _
    %362 = vsyncpa [#allocation3], 1
    %363 = vsyncpa [#allocation6], 1
    %364 = vsyncpa [#allocation9], 1
    %365 = vsyncpa [#allocation4], 1

</llo_original>
